<compile_context>
chip_gen: v6e
topology: v6e:2x2x1
jax: 0.10.0
libtpu: 0.0.40
codegen_flags: <defaults>
</compile_context>

<pallas_src>
import functools

import jax
import jax.numpy as jnp
from jax.experimental import pallas as pl


def _to_copy_expand_kernel(x_ref, y_ref, o_ref, *, m):
    # x_ref: (B, N) f32 ; y_ref / o_ref: (B, M*N) f32 (lane-dense flat view).
    # bf16 round-trip on the small tile first (cast-before-broadcast).
    x_rt = x_ref[...].astype(jnp.bfloat16).astype(jnp.float32)
    # aten.expand along dim 1, flattened: out_flat[b, m*N + n] = x[b, 0, n]
    # == the (B, N) row block tiled m times along the lane axis.
    x_exp = jnp.tile(x_rt, (1, m))
    o_ref[...] = x_exp + jnp.abs(y_ref[...])


@functools.partial(jax.jit, static_argnums=(2,), donate_argnums=(1,))
def to_copy_expand(x, y, target_shape):
    B, M, N = target_shape
    assert x.shape == (B, 1, N)
    assert y.shape == (B, M, N)
    assert (M * N) % 128 == 0, "lane-dense layout expects M*N % 128 == 0"

    # Lane-dense views: last dim M*N = 1024 (multiple of 128). Contiguous
    # row-major reshapes — free at the XLA level.
    x_flat = x.reshape(B, N)
    y_flat = y.reshape(B, M * N)

    out_flat = pl.pallas_call(
        functools.partial(_to_copy_expand_kernel, m=M),
        out_shape=jax.ShapeDtypeStruct((B, M * N), jnp.float32),
        grid=(1,),  # single step: whole problem resident in VMEM
        in_specs=[
            pl.BlockSpec((B, N), lambda i: (0, 0)),
            pl.BlockSpec((B, M * N), lambda i: (0, 0)),
        ],
        out_specs=pl.BlockSpec((B, M * N), lambda i: (0, 0)),
        input_output_aliases={1: 0},  # output reuses donated y buffer
    )(x_flat, y_flat)

    return out_flat.reshape(B, M, N)


if __name__ == "__main__":
    key = jax.random.PRNGKey(0)
    kx, ky = jax.random.split(key)

    target_shape = (16, 32, 32)
    x = jax.random.normal(kx, (16, 1, 32), dtype=jnp.float32)
    y = jax.random.normal(ky, (16, 32, 32), dtype=jnp.float32)

    # Reference computed (and materialized) BEFORE the kernel call, since y is
    # donated to the kernel.
    ref = jnp.broadcast_to(x.astype(jnp.bfloat16), target_shape).astype(
        jnp.float32
    ) + jnp.abs(y)
    ref = jax.block_until_ready(ref)

    out = to_copy_expand(x, y, target_shape)
    out = jax.block_until_ready(out)

    assert out.shape == target_shape and out.dtype == jnp.float32
    assert jnp.allclose(out, ref, atol=1e-6, rtol=1e-6)

    print("KERNEL_OK")
</pallas_src>

<mosaic_0001>
module attributes {stable_mosaic.version = 11 : i64} {
  func.func @_to_copy_expand_kernel(%arg0: i32, %arg1: memref<16x32xf32, #tpu.memory_space<vmem>>, %arg2: memref<16x1024xf32, #tpu.memory_space<vmem>>, %arg3: memref<16x1024xf32, #tpu.memory_space<vmem>>) attributes {dimension_semantics = [#tpu.dimension_semantics<arbitrary>], iteration_bounds = array<i64: 1>, scalar_prefetch = 0 : i64, scratch_operands = 0 : i64, tpu.core_type = #tpu.core_type<tc>, window_params = [{pipeline_mode = #tpu.pipeline_mode<synchronous>, transform_indices = @transform_0, window_bounds = array<i64: 16, 32>}, {pipeline_mode = #tpu.pipeline_mode<synchronous>, transform_indices = @transform_1, window_bounds = array<i64: 16, 1024>}, {pipeline_mode = #tpu.pipeline_mode<synchronous>, transform_indices = @transform_2, window_bounds = array<i64: 16, 1024>}]} {
    %c0 = arith.constant 0 : index
    %c0_0 = arith.constant 0 : index
    %0 = vector.load %arg1[%c0, %c0_0] : memref<16x32xf32, #tpu.memory_space<vmem>>, vector<16x32xf32>
    %1 = arith.truncf %0 : vector<16x32xf32> to vector<16x32xbf16>
    %2 = arith.extf %1 : vector<16x32xbf16> to vector<16x32xf32>
    %3 = tpu.concatenate %2, %2, %2, %2, %2, %2, %2, %2, %2, %2, %2, %2, %2, %2, %2, %2, %2, %2, %2, %2, %2, %2, %2, %2, %2, %2, %2, %2, %2, %2, %2, %2 in 1 : vector<16x32xf32>, vector<16x32xf32>, vector<16x32xf32>, vector<16x32xf32>, vector<16x32xf32>, vector<16x32xf32>, vector<16x32xf32>, vector<16x32xf32>, vector<16x32xf32>, vector<16x32xf32>, vector<16x32xf32>, vector<16x32xf32>, vector<16x32xf32>, vector<16x32xf32>, vector<16x32xf32>, vector<16x32xf32>, vector<16x32xf32>, vector<16x32xf32>, vector<16x32xf32>, vector<16x32xf32>, vector<16x32xf32>, vector<16x32xf32>, vector<16x32xf32>, vector<16x32xf32>, vector<16x32xf32>, vector<16x32xf32>, vector<16x32xf32>, vector<16x32xf32>, vector<16x32xf32>, vector<16x32xf32>, vector<16x32xf32>, vector<16x32xf32> -> vector<16x1024xf32>
    %c0_1 = arith.constant 0 : index
    %c0_2 = arith.constant 0 : index
    %4 = vector.load %arg2[%c0_1, %c0_2] : memref<16x1024xf32, #tpu.memory_space<vmem>>, vector<16x1024xf32>
    %5 = math.absf %4 : vector<16x1024xf32>
    %6 = arith.addf %3, %5 : vector<16x1024xf32>
    %c0_3 = arith.constant 0 : index
    %c0_4 = arith.constant 0 : index
    %7 = vector.load %arg3[%c0_3, %c0_4] : memref<16x1024xf32, #tpu.memory_space<vmem>>, vector<16x1024xf32>
    tpu.vector_store %arg3[%c0_3, %c0_4], %6 {strides = array<i32>} : memref<16x1024xf32, #tpu.memory_space<vmem>>, vector<16x1024xf32>,
    return
  }
  func.func @transform_0(%arg0: i32) -> (i32, i32) {
    %c0_i32 = arith.constant 0 : i32
    %c0_i32_0 = arith.constant 0 : i32
    %c0_i32_1 = arith.constant 0 : i32
    return %c0_i32, %c0_i32_0 : i32, i32
  }
  func.func @transform_1(%arg0: i32) -> (i32, i32) {
    %c0_i32 = arith.constant 0 : i32
    %c0_i32_0 = arith.constant 0 : i32
    %c0_i32_1 = arith.constant 0 : i32
    return %c0_i32, %c0_i32_0 : i32, i32
  }
  func.func @transform_2(%arg0: i32) -> (i32, i32) {
    %c0_i32 = arith.constant 0 : i32
    %c0_i32_0 = arith.constant 0 : i32
    %c0_i32_1 = arith.constant 0 : i32
    return %c0_i32, %c0_i32_0 : i32, i32
  }
}

</mosaic_0001>

<llo_original>
// kernel: to_copy_expand.1
$region0: #{to_copy_expand.1}
  #allocation0 [shape = 'u32[]', space=smem, size = 0x4, offset = 0x4, fixed_abs, tag = 'smem constant byte address 0x4 - core index']
  #allocation1 [shape = 'u32[144,128]{1,0:T(1,128)}', space=vmem, size = 0x12000, scoped, tag = 'internal scratch']
  %s0 = inlined_call_operand.vmem [shape: f32[16,32], index: 0, kind: input, shape index: {}]
  %s1 = inlined_call_operand.vmem [shape: f32[16,1024], index: 1, kind: input, shape index: {}, may-alias: {1,2}]
  %s2 = inlined_call_operand.vmem [shape: f32[16,1024], index: 2, kind: output, shape index: {}, may-alias: {1,2}]
  %s3 = sld [smem:[#allocation0]]
  $region18: #{to_copy_expand.1} parent=0
    _
  %s5 = ssub.s32 1, %s3
  %s6 = scalar_select 0, %s5, %s3
  // Predicated region
  $region2: #{to_copy_expand.1} parent=0 // pred_check
    _
  $region3: #{to_copy_expand.1} parent=0 // pred_check_branch
    %8 = sbr.rel (0) target = $region5
  $region4: #{to_copy_expand.1} parent=0 // pred_region
    _
  $region5: #{to_copy_expand.1} parent=0 // pred_fallthru
    _
  // Predicated region
  $region6: #{to_copy_expand.1} parent=0 // pred_check
    _
  $region7: #{to_copy_expand.1} parent=0 // pred_check_branch
    %10 = sbr.rel (0) target = $region9
  $region8: #{to_copy_expand.1} parent=0 // pred_region
    _
  $region9: #{to_copy_expand.1} parent=0 // pred_fallthru
    _
  %v11 = vld [vmem:[%s0] sm:$0xff]
  %v12 = vld [vmem:[%s0 + $0x8] sm:$0xff]
  %v13 = vpack.c.bf16 %v12, %v11
  %v14 = vunpack.c.l.bf16 %v13
  %v15 = vunpack.c.h.bf16 %v13
  %18 = vrot.lane.b32.xlu0 %v14, 32
  %v19 = vpop.permute.xlu0 %18
  %20 = vrot.lane.b32.xlu0 %v15, 32
  %v21 = vpop.permute.xlu0 %20
  %24 = vrot.lane.b32.xlu0 %v14, 64
  %v25 = vpop.permute.xlu0 %24
  %26 = vrot.lane.b32.xlu0 %v15, 64
  %v27 = vpop.permute.xlu0 %26
  %30 = vrot.lane.b32.xlu0 %v14, 96
  %v31 = vpop.permute.xlu0 %30
  %32 = vrot.lane.b32.xlu0 %v15, 96
  %v33 = vpop.permute.xlu0 %32
  %vm36 = vcmask 261120
  %v37 = vsel %vm36, %v14, %v19
  %v38 = vsel %vm36, %v15, %v21
  %vm39 = vcmask 523264
  %v40 = vsel %vm39, %v37, %v25
  %v41 = vsel %vm39, %v38, %v27
  %vm42 = vcmask 785408
  %v43 = vsel %vm42, %v40, %v31
  %v44 = vsel %vm42, %v41, %v33
  %v45 = vld [vmem:[%s1] sm:$0xff]
  %v46 = vld [vmem:[%s1 + $0x8] sm:$0xff]
  %v47 = vld [vmem:[%s1 + $0x10] sm:$0xff]
  %v48 = vld [vmem:[%s1 + $0x18] sm:$0xff]
  %v49 = vld [vmem:[%s1 + $0x20] sm:$0xff]
  %v50 = vld [vmem:[%s1 + $0x28] sm:$0xff]
  %v51 = vld [vmem:[%s1 + $0x30] sm:$0xff]
  %v52 = vld [vmem:[%s1 + $0x38] sm:$0xff]
  %v53 = vld [vmem:[%s1 + $0x40] sm:$0xff]
  %v54 = vld [vmem:[%s1 + $0x48] sm:$0xff]
  %v55 = vld [vmem:[%s1 + $0x50] sm:$0xff]
  %v56 = vld [vmem:[%s1 + $0x58] sm:$0xff]
  %v57 = vld [vmem:[%s1 + $0x60] sm:$0xff]
  %v58 = vld [vmem:[%s1 + $0x68] sm:$0xff]
  %v59 = vld [vmem:[%s1 + $0x70] sm:$0xff]
  %v60 = vld [vmem:[%s1 + $0x78] sm:$0xff]
  %v61 = vand.u32 2147483647, %v45
  %v62 = vand.u32 2147483647, %v46
  %v63 = vand.u32 2147483647, %v47
  %v64 = vand.u32 2147483647, %v48
  %v65 = vand.u32 2147483647, %v49
  %v66 = vand.u32 2147483647, %v50
  %v67 = vand.u32 2147483647, %v51
  %v68 = vand.u32 2147483647, %v52
  %v69 = vand.u32 2147483647, %v53
  %v70 = vand.u32 2147483647, %v54
  %v71 = vand.u32 2147483647, %v55
  %v72 = vand.u32 2147483647, %v56
  %v73 = vand.u32 2147483647, %v57
  %v74 = vand.u32 2147483647, %v58
  %v75 = vand.u32 2147483647, %v59
  %v76 = vand.u32 2147483647, %v60
  %v77 = vadd.f32 %v43, %v61
  %v78 = vadd.f32 %v43, %v62
  %v79 = vadd.f32 %v43, %v63
  %v80 = vadd.f32 %v43, %v64
  %v81 = vadd.f32 %v43, %v65
  %v82 = vadd.f32 %v43, %v66
  %v83 = vadd.f32 %v43, %v67
  %v84 = vadd.f32 %v43, %v68
  %v85 = vadd.f32 %v44, %v69
  %v86 = vadd.f32 %v44, %v70
  %v87 = vadd.f32 %v44, %v71
  %v88 = vadd.f32 %v44, %v72
  %v89 = vadd.f32 %v44, %v73
  %v90 = vadd.f32 %v44, %v74
  %v91 = vadd.f32 %v44, %v75
  %v92 = vadd.f32 %v44, %v76
  %93 = vst [vmem:[%s2] sm:$0xff] %v77
  %94 = vst [vmem:[%s2 + $0x8] sm:$0xff] %v78
  %95 = vst [vmem:[%s2 + $0x10] sm:$0xff] %v79
  %96 = vst [vmem:[%s2 + $0x18] sm:$0xff] %v80
  %97 = vst [vmem:[%s2 + $0x20] sm:$0xff] %v81
  %98 = vst [vmem:[%s2 + $0x28] sm:$0xff] %v82
  %99 = vst [vmem:[%s2 + $0x30] sm:$0xff] %v83
  %100 = vst [vmem:[%s2 + $0x38] sm:$0xff] %v84
  %101 = vst [vmem:[%s2 + $0x40] sm:$0xff] %v85
  %102 = vst [vmem:[%s2 + $0x48] sm:$0xff] %v86
  %103 = vst [vmem:[%s2 + $0x50] sm:$0xff] %v87
  %104 = vst [vmem:[%s2 + $0x58] sm:$0xff] %v88
  %105 = vst [vmem:[%s2 + $0x60] sm:$0xff] %v89
  %106 = vst [vmem:[%s2 + $0x68] sm:$0xff] %v90
  %107 = vst [vmem:[%s2 + $0x70] sm:$0xff] %v91
  %108 = vst [vmem:[%s2 + $0x78] sm:$0xff] %v92
  // Predicated region
  $region10: #{to_copy_expand.1} parent=0 // pred_check
    _
  $region11: #{to_copy_expand.1} parent=0 // pred_check_branch
    %110 = sbr.rel (0) target = $region13
  $region12: #{to_copy_expand.1} parent=0 // pred_region
    _
  $region13: #{to_copy_expand.1} parent=0 // pred_fallthru
    _
  // Predicated region
  $region14: #{to_copy_expand.1} parent=0 // pred_check
    _
  $region15: #{to_copy_expand.1} parent=0 // pred_check_branch
    %112 = sbr.rel (0) target = $region17
  $region16: #{to_copy_expand.1} parent=0 // pred_region
    _
  $region17: #{to_copy_expand.1} parent=0 // pred_fallthru
    _

</llo_original>
